<compile_context>
chip_gen: v5e
topology: v5e:2x2
jax: 0.10.0
libtpu: 0.0.40
codegen_flags: <defaults>
</compile_context>

<pallas_src>
import math

import jax
import jax.numpy as jnp
from jax.experimental import pallas as pl
from jax.experimental.pallas import tpu as pltpu

_LANES = 128
_SUBLANES = 8
_MAX_TILE_ROWS = 2048  # 2048 * 128 * 4 B = 1 MiB per f32 input block per buffer


def _round_up(x: int, m: int) -> int:
    return -(-x // m) * m


def _choose_tile_rows(rows: int) -> int:
    """Pick a tile height (multiple of 8, <= _MAX_TILE_ROWS).

    Prefer a divisor of `rows` (no padding needed) as long as blocks stay
    reasonably large; otherwise fall back to the cap and pad.
    """
    cap = min(_MAX_TILE_ROWS, _round_up(rows, _SUBLANES))
    for cand in range(cap, 255, -_SUBLANES):
        if rows % cand == 0:
            return cand
    return cap


def _iou_loss_kernel(pred_ref, target_ref, out_ref, and_ref, sum_ref):
    t_idx = pl.program_id(1)

    # Reset the per-image partial sums on the first spatial tile.
    @pl.when(t_idx == 0)
    def _():
        and_ref[...] = jnp.zeros_like(and_ref)
        sum_ref[...] = jnp.zeros_like(sum_ref)

    # Kernel refs are (tile_rows, 128) (batch dim squeezed by BlockSpec).
    p = pred_ref[...].astype(jnp.float32)
    t = target_ref[...].astype(jnp.float32)

    # Regroup rows into whole vregs: (tile_rows, 128) -> (k, 8, 128) is a
    # layout-preserving relabel; reducing over the leading axis is pure VPU
    # vreg adds (no XLU), keeping the inner loop memory-bound only.
    prod = (p * t).reshape(-1, _SUBLANES, _LANES)
    both = (p + t).reshape(-1, _SUBLANES, _LANES)
    and_ref[...] += jnp.sum(prod, axis=0)
    sum_ref[...] += jnp.sum(both, axis=0)

    # Deferred full reduction + divide: only on the last tile of this image
    # (IoU is not additive across spatial tiles).
    @pl.when(t_idx == pl.num_programs(1) - 1)
    def _():
        s_and = jnp.sum(and_ref[...])
        s_sum = jnp.sum(sum_ref[...])
        iou = s_and / (s_sum - s_and)
        # Lane-dense store: fill the whole (8, 128) output block with the
        # per-image loss; the wrapper reads element [:, 0, 0].
        out_ref[...] = jnp.full(out_ref.shape, 1.0 - iou, dtype=out_ref.dtype)


def iou_loss(pred: jax.Array, target: jax.Array) -> jax.Array:
    """Pallas implementation of IoULoss.forward. Returns a scalar (f32)."""
    assert pred.shape == target.shape
    B = pred.shape[0]
    N = math.prod(pred.shape[1:])

    p2 = pred.reshape(B, N)
    t2 = target.reshape(B, N)

    rows = _round_up(N, _LANES) // _LANES
    tile_rows = _choose_tile_rows(rows)
    rows_pad = _round_up(rows, tile_rows)
    n_pad = rows_pad * _LANES
    if n_pad != N:
        # Zero padding leaves both partial sums unchanged.
        p2 = jnp.pad(p2, ((0, 0), (0, n_pad - N)))
        t2 = jnp.pad(t2, ((0, 0), (0, n_pad - N)))

    p3 = p2.reshape(B, rows_pad, _LANES)
    t3 = t2.reshape(B, rows_pad, _LANES)
    n_tiles = rows_pad // tile_rows

    out = pl.pallas_call(
        _iou_loss_kernel,
        out_shape=jax.ShapeDtypeStruct((B, _SUBLANES, _LANES), jnp.float32),
        grid_spec=pltpu.PrefetchScalarGridSpec(
            num_scalar_prefetch=0,
            grid=(B, n_tiles),
            in_specs=[
                pl.BlockSpec(
                    (pl.Squeezed(), tile_rows, _LANES), lambda b, t: (b, t, 0)
                ),
                pl.BlockSpec(
                    (pl.Squeezed(), tile_rows, _LANES), lambda b, t: (b, t, 0)
                ),
            ],
            out_specs=pl.BlockSpec(
                (pl.Squeezed(), _SUBLANES, _LANES), lambda b, t: (b, 0, 0)
            ),
            scratch_shapes=[
                pltpu.VMEM((_SUBLANES, _LANES), jnp.float32),  # running sum(p * t)
                pltpu.VMEM((_SUBLANES, _LANES), jnp.float32),  # running sum(p + t)
            ],
        ),
        compiler_params=pltpu.CompilerParams(
            dimension_semantics=("parallel", "arbitrary"),
        ),
    )(p3, t3)

    # Per-image (1 - IoU), summed over the batch — same as the PyTorch loop.
    return jnp.sum(out[:, 0, 0])


def _iou_loss_ref(pred, target):
    # Pure-JAX reference matching the PyTorch loop semantics.
    pred = pred.astype(jnp.float32)
    target = target.astype(jnp.float32)
    iand = jnp.sum(target * pred, axis=(1, 2, 3))
    ior = jnp.sum(target, axis=(1, 2, 3)) + jnp.sum(pred, axis=(1, 2, 3)) - iand
    return jnp.sum(1.0 - iand / ior)


if __name__ == "__main__":
    key = jax.random.PRNGKey(0)
    k1, k2 = jax.random.split(key)

    B, C, H, W = 2, 4, 16, 16
    # Positive, sigmoid-like values (as produced by a segmentation head).
    pred = jax.nn.sigmoid(jax.random.normal(k1, (B, C, H, W), dtype=jnp.float32))
    target = (jax.random.uniform(k2, (B, C, H, W), dtype=jnp.float32) > 0.5).astype(
        jnp.float32
    )

    loss = jax.block_until_ready(iou_loss(pred, target))
    ref = _iou_loss_ref(pred, target)
    assert jnp.allclose(loss, ref, rtol=1e-5, atol=1e-5), (loss, ref)

    # Also exercise the padding path (C*H*W not a multiple of 128).
    k3, k4 = jax.random.split(k1)
    pred2 = jax.nn.sigmoid(jax.random.normal(k3, (2, 3, 10, 10), dtype=jnp.float32))
    target2 = (jax.random.uniform(k4, (2, 3, 10, 10)) > 0.5).astype(jnp.float32)
    loss2 = jax.block_until_ready(iou_loss(pred2, target2))
    ref2 = _iou_loss_ref(pred2, target2)
    assert jnp.allclose(loss2, ref2, rtol=1e-5, atol=1e-5), (loss2, ref2)

    # Multi-tile path (several grid steps along the reduction axis) + bf16.
    k5, k6 = jax.random.split(k2)
    pred3 = jax.nn.sigmoid(
        jax.random.normal(k5, (2, 1, 128, 256), dtype=jnp.float32)
    ).astype(jnp.bfloat16)
    target3 = (jax.random.uniform(k6, (2, 1, 128, 256)) > 0.5).astype(jnp.bfloat16)
    loss3 = jax.block_until_ready(iou_loss(pred3, target3))
    ref3 = _iou_loss_ref(pred3, target3)
    assert jnp.allclose(loss3, ref3, rtol=1e-2, atol=1e-2), (loss3, ref3)

    print("KERNEL_OK")
</pallas_src>

<mosaic_0001>
module attributes {stable_mosaic.version = 11 : i64} {
  func.func @_iou_loss_kernel(%arg0: i32, %arg1: i32, %arg2: memref<1x8x128xf32, #tpu.memory_space<vmem>>, %arg3: memref<1x8x128xf32, #tpu.memory_space<vmem>>, %arg4: memref<1x8x128xf32, #tpu.memory_space<vmem>>, %arg5: memref<8x128xf32, #tpu.memory_space<vmem>>, %arg6: memref<8x128xf32, #tpu.memory_space<vmem>>) attributes {dimension_semantics = [#tpu.dimension_semantics<parallel>, #tpu.dimension_semantics<arbitrary>], iteration_bounds = array<i64: 2, 1>, scalar_prefetch = 0 : i64, scratch_operands = 2 : i64, tpu.core_type = #tpu.core_type<tc>, window_params = [{transform_indices = @transform_0, window_bounds = array<i64: 1, 8, 128>}, {transform_indices = @transform_1, window_bounds = array<i64: 1, 8, 128>}, {transform_indices = @transform_2, window_bounds = array<i64: 1, 8, 128>}]} {
    %c0_i32 = arith.constant 0 : i32
    %0 = arith.cmpi eq, %arg1, %c0_i32 : i32
    %1 = arith.extui %0 : i1 to i32
    %c0_i32_0 = arith.constant 0 : i32
    %2 = arith.cmpi ne, %1, %c0_i32_0 : i32
    scf.if %2 {
      %cst_17 = arith.constant 0.000000e+00 : f32
      %22 = vector.broadcast %cst_17 : f32 to vector<8x128xf32>
      %c0_18 = arith.constant 0 : index
      %c0_19 = arith.constant 0 : index
      %23 = vector.load %arg5[%c0_18, %c0_19] : memref<8x128xf32, #tpu.memory_space<vmem>>, vector<8x128xf32>
      tpu.vector_store %arg5[%c0_18, %c0_19], %22 {strides = array<i32>} : memref<8x128xf32, #tpu.memory_space<vmem>>, vector<8x128xf32>,
      %cst_20 = arith.constant 0.000000e+00 : f32
      %24 = vector.broadcast %cst_20 : f32 to vector<8x128xf32>
      %c0_21 = arith.constant 0 : index
      %c0_22 = arith.constant 0 : index
      %25 = vector.load %arg6[%c0_21, %c0_22] : memref<8x128xf32, #tpu.memory_space<vmem>>, vector<8x128xf32>
      tpu.vector_store %arg6[%c0_21, %c0_22], %24 {strides = array<i32>} : memref<8x128xf32, #tpu.memory_space<vmem>>, vector<8x128xf32>,
    } else {
    }
    %c0 = arith.constant 0 : index
    %c0_1 = arith.constant 0 : index
    %c0_2 = arith.constant 0 : index
    %3 = vector.load %arg2[%c0, %c0_1, %c0_2] : memref<1x8x128xf32, #tpu.memory_space<vmem>>, vector<1x8x128xf32>
    %4 = vector.shape_cast %3 : vector<1x8x128xf32> to vector<8x128xf32>
    %c0_3 = arith.constant 0 : index
    %c0_4 = arith.constant 0 : index
    %c0_5 = arith.constant 0 : index
    %5 = vector.load %arg3[%c0_3, %c0_4, %c0_5] : memref<1x8x128xf32, #tpu.memory_space<vmem>>, vector<1x8x128xf32>
    %6 = vector.shape_cast %5 : vector<1x8x128xf32> to vector<8x128xf32>
    %7 = arith.mulf %4, %6 : vector<8x128xf32>
    %8 = vector.shape_cast %7 : vector<8x128xf32> to vector<1x8x128xf32>
    %9 = arith.addf %4, %6 : vector<8x128xf32>
    %10 = vector.shape_cast %9 : vector<8x128xf32> to vector<1x8x128xf32>
    %c0_6 = arith.constant 0 : index
    %c0_7 = arith.constant 0 : index
    %11 = vector.load %arg5[%c0_6, %c0_7] : memref<8x128xf32, #tpu.memory_space<vmem>>, vector<8x128xf32>
    %cst = arith.constant dense<0.000000e+00> : vector<8x128xf32>
    %12 = vector.multi_reduction <add>, %8, %cst [0] : vector<1x8x128xf32> to vector<8x128xf32>
    %13 = arith.addf %11, %12 : vector<8x128xf32>
    %c0_8 = arith.constant 0 : index
    %c0_9 = arith.constant 0 : index
    %14 = vector.load %arg5[%c0_8, %c0_9] : memref<8x128xf32, #tpu.memory_space<vmem>>, vector<8x128xf32>
    tpu.vector_store %arg5[%c0_8, %c0_9], %13 {strides = array<i32>} : memref<8x128xf32, #tpu.memory_space<vmem>>, vector<8x128xf32>,
    %c0_10 = arith.constant 0 : index
    %c0_11 = arith.constant 0 : index
    %15 = vector.load %arg6[%c0_10, %c0_11] : memref<8x128xf32, #tpu.memory_space<vmem>>, vector<8x128xf32>
    %cst_12 = arith.constant dense<0.000000e+00> : vector<8x128xf32>
    %16 = vector.multi_reduction <add>, %10, %cst_12 [0] : vector<1x8x128xf32> to vector<8x128xf32>
    %17 = arith.addf %15, %16 : vector<8x128xf32>
    %c0_13 = arith.constant 0 : index
    %c0_14 = arith.constant 0 : index
    %18 = vector.load %arg6[%c0_13, %c0_14] : memref<8x128xf32, #tpu.memory_space<vmem>>, vector<8x128xf32>
    tpu.vector_store %arg6[%c0_13, %c0_14], %17 {strides = array<i32>} : memref<8x128xf32, #tpu.memory_space<vmem>>, vector<8x128xf32>,
    %c0_i32_15 = arith.constant 0 : i32
    %19 = arith.cmpi eq, %arg1, %c0_i32_15 : i32
    %20 = arith.extui %19 : i1 to i32
    %c0_i32_16 = arith.constant 0 : i32
    %21 = arith.cmpi ne, %20, %c0_i32_16 : i32
    scf.if %21 {
      %c0_17 = arith.constant 0 : index
      %c0_18 = arith.constant 0 : index
      %22 = vector.load %arg5[%c0_17, %c0_18] : memref<8x128xf32, #tpu.memory_space<vmem>>, vector<8x128xf32>
      %23 = vector.shape_cast %22 : vector<8x128xf32> to vector<1x8x128xf32>
      %cst_19 = arith.constant dense<0.000000e+00> : vector<1xf32>
      %24 = vector.multi_reduction <add>, %23, %cst_19 [1, 2] : vector<1x8x128xf32> to vector<1xf32>
      %25 = vector.shape_cast %24 : vector<1xf32> to vector<1x1x1xf32>
      %26 = vector.extract %25[0, 0, 0] : f32 from vector<1x1x1xf32>
      %c0_20 = arith.constant 0 : index
      %c0_21 = arith.constant 0 : index
      %27 = vector.load %arg6[%c0_20, %c0_21] : memref<8x128xf32, #tpu.memory_space<vmem>>, vector<8x128xf32>
      %28 = vector.shape_cast %27 : vector<8x128xf32> to vector<1x8x128xf32>
      %cst_22 = arith.constant dense<0.000000e+00> : vector<1xf32>
      %29 = vector.multi_reduction <add>, %28, %cst_22 [1, 2] : vector<1x8x128xf32> to vector<1xf32>
      %30 = vector.shape_cast %29 : vector<1xf32> to vector<1x1x1xf32>
      %31 = vector.extract %30[0, 0, 0] : f32 from vector<1x1x1xf32>
      %32 = arith.subf %31, %26 : f32
      %33 = arith.divf %26, %32 : f32
      %cst_23 = arith.constant 1.000000e+00 : f32
      %34 = arith.subf %cst_23, %33 : f32
      %35 = vector.broadcast %34 : f32 to vector<8x128xf32>
      %c0_24 = arith.constant 0 : index
      %c0_25 = arith.constant 0 : index
      %c0_26 = arith.constant 0 : index
      %36 = vector.load %arg4[%c0_24, %c0_25, %c0_26] : memref<1x8x128xf32, #tpu.memory_space<vmem>>, vector<1x8x128xf32>
      %37 = vector.shape_cast %36 : vector<1x8x128xf32> to vector<8x128xf32>
      %38 = vector.shape_cast %35 : vector<8x128xf32> to vector<1x8x128xf32>
      tpu.vector_store %arg4[%c0_24, %c0_25, %c0_26], %38 {strides = array<i32>} : memref<1x8x128xf32, #tpu.memory_space<vmem>>, vector<1x8x128xf32>,
    } else {
    }
    return
  }
  func.func @transform_0(%arg0: i32, %arg1: i32) -> (i32, i32, i32) {
    %c0_i32 = arith.constant 0 : i32
    %c0_i32_0 = arith.constant 0 : i32
    return %arg0, %arg1, %c0_i32 : i32, i32, i32
  }
  func.func @transform_1(%arg0: i32, %arg1: i32) -> (i32, i32, i32) {
    %c0_i32 = arith.constant 0 : i32
    %c0_i32_0 = arith.constant 0 : i32
    return %arg0, %arg1, %c0_i32 : i32, i32, i32
  }
  func.func @transform_2(%arg0: i32, %arg1: i32) -> (i32, i32, i32) {
    %c0_i32 = arith.constant 0 : i32
    %c0_i32_0 = arith.constant 0 : i32
    %c0_i32_1 = arith.constant 0 : i32
    return %arg0, %c0_i32, %c0_i32_0 : i32, i32, i32
  }
}

</mosaic_0001>

<llo_original>
// kernel: tpu_custom_call.1
$region0: #{tpu_custom_call.1}
  #allocation0 [shape = 'u32[]', space=smem, size = 0x4, offset = 0x4, fixed_abs, tag = 'smem constant byte address 0x4 - core index']
  #allocation1 [shape = 'u32[72,128]{1,0:T(1,128)}', space=vmem, size = 0x9000, scoped, tag = 'internal scratch']
  #allocation2 [shape = 'f32[8,128]{1,0:T(8,128)}', space=vmem, size = 0x1000, scoped, tag = 'scratch operand']
  #allocation3 [shape = 'f32[8,128]{1,0:T(8,128)}', space=vmem, size = 0x1000, scoped, tag = 'scratch operand']
  %s0 = inlined_call_operand.hbm [shape: f32[2,8,128], index: 0, kind: input, shape index: {}]
  %s1 = inlined_call_operand.hbm [shape: f32[2,8,128], index: 1, kind: input, shape index: {}]
  %s2 = inlined_call_operand.hbm [shape: f32[2,8,128], index: 2, kind: output, shape index: {}]
  %s3 = sld [smem:[#allocation0]]
  $region57: #{tpu_custom_call.1} parent=0
    _
  %s5 = ssub.s32 1, %s3
  %s6 = scalar_select 0, %s5, %s3
  $region1: #{tpu_custom_call.1} parent=0
    #allocation4 [shape = 'u8[8192]{0}', space=vmem, size = 0x2000, scoped, tag = 'input window, operand 0']
    #allocation5 [shape = 's32[2]{0}', space=sflag, size = 0x8, scoped, tag = 'scoped memory for tpu_custom_call.1']
    #allocation6 [shape = 's32[2]{0}', space=sflag, size = 0x8, scoped, tag = 'scoped memory for tpu_custom_call.1']
    #allocation7 [shape = 'u8[8192]{0}', space=vmem, size = 0x2000, scoped, tag = 'input window, operand 1']
    #allocation8 [shape = 's32[2]{0}', space=sflag, size = 0x8, scoped, tag = 'scoped memory for tpu_custom_call.1']
    #allocation9 [shape = 'u8[8192]{0}', space=vmem, size = 0x2000, scoped, tag = 'output window, operand 0']
    %7 = vsyncpa [#allocation5], 0
    %s8 = scalar_lea.sflag [#allocation5], 1
    %9 = vsyncpa %s8, 0
    %10 = vsyncpa [#allocation8], 0
    %s11 = scalar_lea.sflag [#allocation8], 1
    %12 = vsyncpa %s11, 0
    %13 = vsyncpa [#allocation6], 0
    %s14 = scalar_lea.sflag [#allocation6], 1
    %15 = vsyncpa %s14, 0
    loop: start=0, step=1, limit=4
    $region2: #{tpu_custom_call.1} parent=1 // loop_pre_header
      _
    $region3: #{tpu_custom_call.1} parent=1 // loop_header
      %s17 = sphi 0, %s21
      %p18 = scmp.ge.s32.totalorder %s17, 4
      %s24 = sphi 0, %s36
      %s25 = sphi 0, %s32
      %s26 = sphi 0, %s24
      %s27 = sphi 0, %s25
      %s28 = sphi 0, %s26
      %s29 = sphi 0, %s27
      %s41 = sphi 0, %s43
      %s44 = sphi 0, %s41
      %s45 = sphi 0, %s44
      %s61 = sphi 0, %s45
      %s69 = sphi 0, %s71
      %s72 = sphi 0, %s69
      %s73 = sphi 0, %s72
      %s89 = sphi 0, %s73
      %s95 = sphi 0, %s97
      %s98 = sphi 0, %s95
      %s99 = sphi 0, %s98
      %s115 = sphi 0, %s99
    $region4: #{tpu_custom_call.1} parent=1 // loop_header_branch
      %20 = sbr.rel (%p18) target = $region8
    $region5: #{tpu_custom_call.1} parent=1 // loop_body
      %s22 = ssub.s32 %s17, 1
      %s23 = ssub.s32 %s17, 2
      %s30 = sadd.s32 1, %s25
      %p31 = scmp.ge.s32.totalorder %s30, 1
      %s32 = scalar_select %p31, 0, %s30
      %s33 = sadd.s32 1, %s24
      %s34 = scalar_select %p31, %s33, %s24
      %p35 = scmp.ge.s32.totalorder %s34, 2
      %s36 = scalar_select %p35, 0, %s34
      %s37 = ssub.s32 %s24, %s36
      %s38 = ssub.s32 %s25, %s32
      %s39 = sor.u32 %s37, %s38
      %p40 = scmp.eq.s32.totalorder %s39, 0
      %s42 = sadd.s32 %s41, 1
      %s43 = scalar_select %p40, %s41, %s42
      %p46 = pneg %p40
      %p47 = scmp.eq.s32.totalorder %s17, 1
      %p48 = por %p46, %p47
      %p49 = scmp.ne.s32.totalorder %s41, %s44
      %p50 = scmp.eq.s32.totalorder %s17, 0
      %p51 = por %p49, %p50
      %p52 = scmp.ne.s32.totalorder %s41, %s44
      %p53 = scmp.eq.s32.totalorder %s22, 1
      %p54 = por %p52, %p53
      %p55 = scmp.ne.s32.totalorder %s44, %s45
      %p56 = scmp.eq.s32.totalorder %s22, 0
      %p57 = por %p55, %p56
      %p58 = scmp.ne.s32.totalorder %s44, %s45
      %p59 = scmp.eq.s32.totalorder %s23, 1
      %p60 = por %p58, %p59
      %p62 = scmp.ne.s32.totalorder %s45, %s61
      %p63 = scmp.eq.s32.totalorder %s23, 0
      %p64 = por %p62, %p63
      %s65 = ssub.s32 %s24, %s36
      %s66 = ssub.s32 %s25, %s32
      %s67 = sor.u32 %s65, %s66
      %p68 = scmp.eq.s32.totalorder %s67, 0
      %s70 = sadd.s32 %s69, 1
      %s71 = scalar_select %p68, %s69, %s70
      %p74 = pneg %p68
      %p75 = scmp.eq.s32.totalorder %s17, 1
      %p76 = por %p74, %p75
      %p77 = scmp.ne.s32.totalorder %s69, %s72
      %p78 = scmp.eq.s32.totalorder %s17, 0
      %p79 = por %p77, %p78
      %p80 = scmp.ne.s32.totalorder %s69, %s72
      %p81 = scmp.eq.s32.totalorder %s22, 1
      %p82 = por %p80, %p81
      %p83 = scmp.ne.s32.totalorder %s72, %s73
      %p84 = scmp.eq.s32.totalorder %s22, 0
      %p85 = por %p83, %p84
      %p86 = scmp.ne.s32.totalorder %s72, %s73
      %p87 = scmp.eq.s32.totalorder %s23, 1
      %p88 = por %p86, %p87
      %p90 = scmp.ne.s32.totalorder %s73, %s89
      %p91 = scmp.eq.s32.totalorder %s23, 0
      %p92 = por %p90, %p91
      %s93 = ssub.s32 %s24, %s36
      %p94 = scmp.eq.s32.totalorder %s93, 0
      %s96 = sadd.s32 %s95, 1
      %s97 = scalar_select %p94, %s95, %s96
      %p100 = pneg %p94
      %p101 = scmp.eq.s32.totalorder %s17, 1
      %p102 = por %p100, %p101
      %p103 = scmp.ne.s32.totalorder %s95, %s98
      %p104 = scmp.eq.s32.totalorder %s17, 0
      %p105 = por %p103, %p104
      %p106 = scmp.ne.s32.totalorder %s95, %s98
      %p107 = scmp.eq.s32.totalorder %s22, 1
      %p108 = por %p106, %p107
      %p109 = scmp.ne.s32.totalorder %s98, %s99
      %p110 = scmp.eq.s32.totalorder %s22, 0
      %p111 = por %p109, %p110
      %p112 = scmp.ne.s32.totalorder %s98, %s99
      %p113 = scmp.eq.s32.totalorder %s23, 1
      %p114 = por %p112, %p113
      %p116 = scmp.ne.s32.totalorder %s99, %s115
      %p117 = scmp.eq.s32.totalorder %s23, 0
      %p118 = por %p116, %p117
      %p119 = scmp.le.s32.totalorder 1, %s17
      %p120 = scmp.lt.s32.totalorder %s17, 3
      %p121 = pnand %p119, %p120
      %p122 = pneg %p121
      // Predicated region
      $region9: #{tpu_custom_call.1} parent=5 // pred_check
        _
      $region10: #{tpu_custom_call.1} parent=5 // pred_check_branch
        %124 = sbr.rel (%p121) target = $region12
      $region11: #{tpu_custom_call.1} parent=5 // pred_region
        %s125 = ssub.s32 %s17, 1
      $region12: #{tpu_custom_call.1} parent=5 // pred_fallthru
        _
      %p126 = scmp.lt.s32.totalorder %s17, 2
      // Predicated region
      $region13: #{tpu_custom_call.1} parent=5 // pred_check
        %p127 = pneg %p126
      $region14: #{tpu_custom_call.1} parent=5 // pred_check_branch
        %129 = sbr.rel (%p127) target = $region16
      $region15: #{tpu_custom_call.1} parent=5 // pred_region
        // Predicated region
        $region17: #{tpu_custom_call.1} parent=15 // pred_check
          %p130 = pneg %p51
        $region18: #{tpu_custom_call.1} parent=15 // pred_check_branch
          %132 = sbr.rel (%p130) target = $region20
        $region19: #{tpu_custom_call.1} parent=15 // pred_region
          %s133 = sand.u32 %s41, 1
          %s134 = scalar_lea.sflag [#allocation5], %s133
          %s135 = sand.u32 %s41, 1
          %s136 = smul.addr %s135, 8
          %s137 = scalar_lea.vmem [#allocation4], %s136
          %139 = vsyncadd %s134, 0
          %s140 = sadd.s32 %s25, %s24
          %s141 = smul.addr %s140, 8
          %s142 = scalar_lea.hbm %s0, %s141
          %s144 = sshll.u32 %s142, 4
          %s145 = int_to_ptr.hbm [resolvable:$true] %s144
          %s146 = sshll.u32 %s137, 4
          %s147 = int_to_ptr.vmem [resolvable:$true] %s146
          %149 = dma.hbm_to_vmem [thread:$0]  %s145, 128, %s147, %s134
        $region20: #{tpu_custom_call.1} parent=15 // pred_fallthru
          _
        // Predicated region
        $region21: #{tpu_custom_call.1} parent=15 // pred_check
          %p150 = pneg %p79
        $region22: #{tpu_custom_call.1} parent=15 // pred_check_branch
          %152 = sbr.rel (%p150) target = $region24
        $region23: #{tpu_custom_call.1} parent=15 // pred_region
          %s153 = sand.u32 %s69, 1
          %s154 = scalar_lea.sflag [#allocation8], %s153
          %s155 = sand.u32 %s69, 1
          %s156 = smul.addr %s155, 8
          %s157 = scalar_lea.vmem [#allocation7], %s156
          %159 = vsyncadd %s154, 0
          %s160 = sadd.s32 %s25, %s24
          %s161 = smul.addr %s160, 8
          %s162 = scalar_lea.hbm %s1, %s161
          %s164 = sshll.u32 %s162, 4
          %s165 = int_to_ptr.hbm [resolvable:$true] %s164
          %s166 = sshll.u32 %s157, 4
          %s167 = int_to_ptr.vmem [resolvable:$true] %s166
          %169 = dma.hbm_to_vmem [thread:$0]  %s165, 128, %s167, %s154
        $region24: #{tpu_custom_call.1} parent=15 // pred_fallthru
          _
      $region16: #{tpu_custom_call.1} parent=5 // pred_fallthru
        _
      %p170 = scmp.le.s32.totalorder 1, %s17
      %p171 = scmp.lt.s32.totalorder %s17, 3
      %p172 = pnand %p170, %p171
      %p173 = pneg %p172
      // Predicated region
      $region25: #{tpu_custom_call.1} parent=5 // pred_check
        _
      $region26: #{tpu_custom_call.1} parent=5 // pred_check_branch
        %175 = sbr.rel (%p172) target = $region28
      $region27: #{tpu_custom_call.1} parent=5 // pred_region
        %s176 = ssub.s32 %s17, 1
        %s177 = sand.u32 %s44, 1
        %s178 = scalar_lea.sflag [#allocation5], %s177
        %s179 = sand.u32 %s44, 1
        %s180 = smul.addr %s179, 8
        %s181 = scalar_lea.vmem [#allocation4], %s180
        // Predicated region
        $region29: #{tpu_custom_call.1} parent=27 // pred_check
          %p182 = pneg %p57
        $region30: #{tpu_custom_call.1} parent=27 // pred_check_branch
          %184 = sbr.rel (%p182) target = $region32
        $region31: #{tpu_custom_call.1} parent=27 // pred_region
          %186 = dma.done %s178, 128
        $region32: #{tpu_custom_call.1} parent=27 // pred_fallthru
          _
        %s187 = sand.u32 %s72, 1
        %s188 = scalar_lea.sflag [#allocation8], %s187
        %s189 = sand.u32 %s72, 1
        %s190 = smul.addr %s189, 8
        %s191 = scalar_lea.vmem [#allocation7], %s190
        // Predicated region
        $region33: #{tpu_custom_call.1} parent=27 // pred_check
          %p192 = pneg %p85
        $region34: #{tpu_custom_call.1} parent=27 // pred_check_branch
          %194 = sbr.rel (%p192) target = $region36
        $region35: #{tpu_custom_call.1} parent=27 // pred_region
          %196 = dma.done %s188, 128
        $region36: #{tpu_custom_call.1} parent=27 // pred_fallthru
          _
        %s197 = sand.u32 %s44, 1
        %s198 = scalar_lea.sflag [#allocation5], %s197
        %s199 = sand.u32 %s44, 1
        %s200 = smul.addr %s199, 8
        %s201 = scalar_lea.vmem [#allocation4], %s200
        %p202 = pneg %p57
        %p203 = pneg %p54
        %s204 = sand.u32 %s72, 1
        %s205 = scalar_lea.sflag [#allocation8], %s204
        %s206 = sand.u32 %s72, 1
        %s207 = smul.addr %s206, 8
        %s208 = scalar_lea.vmem [#allocation7], %s207
        %p209 = pneg %p85
        %p210 = pneg %p82
        %p211 = pneg %p111
        %p212 = pneg %p108
        %s213 = sand.u32 %s98, 1
        %s214 = scalar_lea.sflag [#allocation6], %s213
        %s215 = sand.u32 %s98, 1
        %s216 = smul.addr %s215, 8
        %s217 = scalar_lea.vmem [#allocation9], %s216
        %p218 = scmp.eq.s32.totalorder %s27, 0
        // Predicated region
        $region37: #{tpu_custom_call.1} parent=27 // pred_check
          %p219 = pneg %p218
        $region38: #{tpu_custom_call.1} parent=27 // pred_check_branch
          %221 = sbr.rel (%p219) target = $region40
        $region39: #{tpu_custom_call.1} parent=27 // pred_region
          %222 = vst [vmem:[#allocation2] sm:$0xff] 0.0
          %223 = vst [vmem:[#allocation3] sm:$0xff] 0.0
        $region40: #{tpu_custom_call.1} parent=27 // pred_fallthru
          _
        %v224 = vld [vmem:[%s181] sm:$0xff]
        %v225 = vld [vmem:[%s191] sm:$0xff]
        %v226 = vmul.f32 %v224, %v225
        %v227 = vadd.f32 %v224, %v225
        %v228 = vld [vmem:[#allocation2] sm:$0xff]
        %v229 = vadd.f32 %v226, 0.0
        %v230 = vadd.f32 %v228, %v229
        %231 = vst [vmem:[#allocation2] sm:$0xff] %v230
        %v232 = vld [vmem:[#allocation3] sm:$0xff]
        %v233 = vadd.f32 %v227, 0.0
        %v234 = vadd.f32 %v232, %v233
        %235 = vst [vmem:[#allocation3] sm:$0xff] %v234
        // Predicated region
        $region41: #{tpu_custom_call.1} parent=27 // pred_check
          %p236 = pneg %p218
        $region42: #{tpu_custom_call.1} parent=27 // pred_check_branch
          %238 = sbr.rel (%p236) target = $region44
        $region43: #{tpu_custom_call.1} parent=27 // pred_region
          %v239 = vld [vmem:[#allocation2] sm:$0xff]
          %240 = vadd.xlane.f32.xlu0 %v239
          %v241 = vpop.xlane.xlu0 %240
          %v242 = vrot.slane %v241, 4
          %v243 = vadd.f32 %v241, %v242
          %v244 = vrot.slane %v243, 2
          %v245 = vadd.f32 %v243, %v244
          %v246 = vrot.slane %v245, 1
          %v247 = vadd.f32 %v245, %v246
          %s248 = vtos %v247
          %v249 = vld [vmem:[#allocation3] sm:$0xff]
          %250 = vadd.xlane.f32.xlu0 %v249
          %v251 = vpop.xlane.xlu0 %250
          %v252 = vrot.slane %v251, 4
          %v253 = vadd.f32 %v251, %v252
          %v254 = vrot.slane %v253, 2
          %v255 = vadd.f32 %v253, %v254
          %v256 = vrot.slane %v255, 1
          %v257 = vadd.f32 %v255, %v256
          %s258 = vtos %v257
          %s259 = ssub.f32 %s258, %s248
          %v260 = vstv %s259
          %v261 = vrcp.pop %v260
          %v262 = vmul.f32 %v260, %v261
          %v263 = vsub.f32 1.0, %v262
          %v264 = vmul.f32 %v261, %v263
          %v265 = vadd.f32 %v261, %v264
          %vm266 = vweird.f32 %v260
          %vm267 = vweird.f32 %v261
          %vm268 = vmor %vm266, %vm267
          %v269 = vsel %vm268, %v261, %v265
          %v270 = vand.u32 2147483647, %v260
          %vm271 = vcmp.eq.f32.partialorder %v270, 8.507059e+37
          %v272 = vand.u32 %v260, 2147483648
          %v273 = vor.u32 1.1754944e-38, %v272
          %v274 = vsel %vm271, %v273, %v269
          %s275 = vtos %v274
          %s276 = smul.f32 %s248, %s275
          %s277 = ssub.f32 1.0, %s276
          %v278 = vstv %s277
          %279 = vst [vmem:[%s217] sm:$0xff] %v278
        $region44: #{tpu_custom_call.1} parent=27 // pred_fallthru
          _
        %s280 = sand.u32 %s98, 1
        %s281 = scalar_lea.sflag [#allocation6], %s280
        %s282 = sand.u32 %s98, 1
        %s283 = smul.addr %s282, 8
        %s284 = scalar_lea.vmem [#allocation9], %s283
        // Predicated region
        $region45: #{tpu_custom_call.1} parent=27 // pred_check
          %p285 = pneg %p108
        $region46: #{tpu_custom_call.1} parent=27 // pred_check_branch
          %287 = sbr.rel (%p285) target = $region48
        $region47: #{tpu_custom_call.1} parent=27 // pred_region
          %289 = vsyncadd %s281, 0
          %s290 = smul.addr %s26, 8
          %s291 = scalar_lea.hbm %s2, %s290
          %s293 = sshll.u32 %s284, 4
          %s294 = int_to_ptr.vmem [resolvable:$true] %s293
          %s295 = sshll.u32 %s291, 4
          %s296 = int_to_ptr.hbm [resolvable:$true] %s295
          %298 = dma.vmem_to_hbm [thread:$0]  %s294, 128, %s296, %s281
        $region48: #{tpu_custom_call.1} parent=27 // pred_fallthru
          _
      $region28: #{tpu_custom_call.1} parent=5 // pred_fallthru
        _
      %p299 = scmp.le.s32.totalorder 2, %s17
      // Predicated region
      $region49: #{tpu_custom_call.1} parent=5 // pred_check
        %p300 = pneg %p299
      $region50: #{tpu_custom_call.1} parent=5 // pred_check_branch
        %302 = sbr.rel (%p300) target = $region52
      $region51: #{tpu_custom_call.1} parent=5 // pred_region
        %s303 = ssub.s32 %s17, 2
        // Predicated region
        $region53: #{tpu_custom_call.1} parent=51 // pred_check
          %p304 = pneg %p114
        $region54: #{tpu_custom_call.1} parent=51 // pred_check_branch
          %306 = sbr.rel (%p304) target = $region56
        $region55: #{tpu_custom_call.1} parent=51 // pred_region
          %s307 = sand.u32 %s99, 1
          %s308 = scalar_lea.sflag [#allocation6], %s307
          %s309 = sand.u32 %s99, 1
          %s310 = smul.addr %s309, 8
          %s311 = scalar_lea.vmem [#allocation9], %s310
          %313 = dma.done %s308, 128
        $region56: #{tpu_custom_call.1} parent=51 // pred_fallthru
          _
      $region52: #{tpu_custom_call.1} parent=5 // pred_fallthru
        _
    $region6: #{tpu_custom_call.1} parent=1 // loop_footer
      %s21 = sadd.s32 1, %s17
    $region7: #{tpu_custom_call.1} parent=1 // loop_footer_branch
      %16 = sbr.rel target = $region3
    $region8: #{tpu_custom_call.1} parent=1 // loop_exit
      _
    %314 = vsyncpa [#allocation5], 1
    %s315 = scalar_lea.sflag [#allocation5], 1
    %316 = vsyncpa %s315, 1
    %317 = vsyncpa [#allocation8], 1
    %s318 = scalar_lea.sflag [#allocation8], 1
    %319 = vsyncpa %s318, 1
    %320 = vsyncpa [#allocation6], 1
    %s321 = scalar_lea.sflag [#allocation6], 1
    %322 = vsyncpa %s321, 1

</llo_original>
